<compile_context>
chip_gen: v5e
topology: v5e:2x2
jax: 0.10.0
libtpu: 0.0.40
codegen_flags: <defaults>
</compile_context>

<pallas_src>
import functools
import math
import types

import jax
import jax.numpy as jnp
from jax.experimental import pallas as pl
from jax.experimental.pallas import tpu as pltpu


# ---------------------------------------------------------------------------
# Pallas kernel: fused scaled cross entropy -> per-tile (loss_sum, count)
# ---------------------------------------------------------------------------
def _scaled_ce_partial_kernel(scale_ref, x_ref, t_ref, o_ref, *,
                              ignore_index, n_rows):
    # scale_ref: SMEM (1,) f32   -- exp(logit_scale) (or 1.0 in eval)
    # x_ref:     VMEM (tile_n, V) logits block (input dtype, f32 or bf16)
    # t_ref:     VMEM (tile_n, 1) int32 targets
    # o_ref:     VMEM (8, 128) f32: [0,0] = masked loss sum, [1,0] = count
    tile_n, v = x_ref.shape
    scale = scale_ref[0]
    x = x_ref[...]                                   # keep input dtype
    tgt = t_ref[...]                                 # (tile_n, 1) int32

    # Sweep 1 (input dtype): row max and target logit via a masked max.
    col = jax.lax.broadcasted_iota(jnp.int32, (tile_n, v), 1)
    neg_inf = jnp.asarray(-jnp.inf, x.dtype)
    xm = jnp.max(x, axis=-1, keepdims=True)                              # (tile_n,1)
    xt = jnp.max(jnp.where(col == tgt, x, neg_inf), axis=-1, keepdims=True)

    # Sweep 2 (f32): softmax denominator of the scaled logits.
    xm_f = xm.astype(jnp.float32)
    z = (x.astype(jnp.float32) - xm_f) * scale
    denom = jnp.sum(jnp.exp(z), axis=-1, keepdims=True)                  # (tile_n,1)

    # Per-row loss: CE(scale*x, t) = scale*(max - x_t) + log(sum exp(scale*(x-max)))
    row = pl.program_id(0) * tile_n + jax.lax.broadcasted_iota(
        jnp.int32, (tile_n, 1), 0)
    valid = (tgt != ignore_index) & (row < n_rows)    # tail rows of the last
    loss = scale * (xm_f - xt.astype(jnp.float32)) + jnp.log(denom)
    loss = jnp.where(valid, loss, 0.0)                # partial block -> 0

    # Per-tile partial reductions, written as one lane-dense (8,128) block.
    loss_sum = jnp.sum(loss, axis=0, keepdims=True)                      # (1,1)
    cnt = jnp.sum(valid.astype(jnp.float32), axis=0, keepdims=True)      # (1,1)
    r8 = jax.lax.broadcasted_iota(jnp.int32, (8, 128), 0)
    o_ref[...] = jnp.where(r8 == 0, loss_sum, jnp.where(r8 == 1, cnt, 0.0))


def _round_up(x, m):
    return -(-x // m) * m


def scaled_cross_entropy_sum_count(logits, targets, scale, ignore_index,
                                   max_block_bytes=2 * 1024 * 1024):
    """Masked sum of per-token CE of (scale*logits) vs targets + token count.

    logits: (N, V) float (f32 or bf16 — no wrapper-side upcast/copy),
    targets: (N,) int, scale: scalar.  Returns (loss_sum f32, ntoken i32).
    """
    N, V = logits.shape
    itemsize = jnp.dtype(logits.dtype).itemsize

    # Largest row tile (multiple of 8) whose input block stays under
    # max_block_bytes (dtype-aware), but capped so the grid has >= ~8 steps
    # (pipelining + v7x megacore sharding) whenever N allows it.
    rows_cap = max(8, (max_block_bytes // (itemsize * V)) // 8 * 8)
    rows_for_8_steps = _round_up(max(1, pl.cdiv(N, 8)), 8)
    tile_n = max(8, min(rows_cap, rows_for_8_steps))
    grid = pl.cdiv(N, tile_n)

    # Explicit scoped-VMEM budget: double-buffered input block + a few
    # block-sized f32 temporaries + slack.  Kept under v7x's 64 MiB physical
    # and above v5e's 16 MiB default.
    in_block = tile_n * V * itemsize
    f32_block = tile_n * V * 4
    vmem_limit = int(min(48 * 2**20,
                         max(20 * 2**20,
                             2 * in_block + 3 * f32_block + (1 << 20))))

    targets2d = targets.reshape(N, 1).astype(jnp.int32)
    scale_arr = jnp.asarray(scale, jnp.float32).reshape(1)

    kernel = functools.partial(_scaled_ce_partial_kernel,
                               ignore_index=int(ignore_index), n_rows=N)
    out = pl.pallas_call(
        kernel,
        out_shape=jax.ShapeDtypeStruct((8 * grid, 128), jnp.float32),
        grid_spec=pltpu.PrefetchScalarGridSpec(
            num_scalar_prefetch=0,
            grid=(grid,),
            in_specs=[
                pl.BlockSpec(memory_space=pltpu.MemorySpace.SMEM),   # scale
                pl.BlockSpec((tile_n, V), lambda i: (i, 0)),         # logits
                pl.BlockSpec((tile_n, 1), lambda i: (i, 0)),         # targets
            ],
            out_specs=pl.BlockSpec((8, 128), lambda i: (i, 0)),
        ),
        compiler_params=pltpu.CompilerParams(
            dimension_semantics=("parallel",),
            vmem_limit_bytes=vmem_limit,
        ),
    )(scale_arr, logits, targets2d)

    out = out.reshape(grid, 8, 128)
    loss_sum = out[:, 0, 0].sum()
    ntoken = out[:, 1, 0].astype(jnp.int32).sum()
    return loss_sum, ntoken


# ---------------------------------------------------------------------------
# Module wrapper (mirrors the PyTorch LMLossHead)
# ---------------------------------------------------------------------------
class LMLossHead:
    def __init__(self, cfg, token_vocab, **kwargs):
        self.token_vocab = token_vocab
        if getattr(cfg, "scaling", False):
            self.logit_scale = jnp.asarray(math.log(1.0 / 0.07), jnp.float32)
        else:
            self.logit_scale = jnp.asarray(math.log(1.0 / 1.0), jnp.float32)
        self.ignore_index = int(token_vocab.PAD_IDX)
        self.accuracies = {w: [0.0, 0.0] for w in ["overall"]}
        self.infer_mode = getattr(cfg, "infer_mode", "greedy")
        self.reduce = False
        self.training = True  # nn.Module default

    def report(self, gold_file=None):
        # Host sync only happens here, not per step.
        result = " ".join(
            ["ACC:"]
            + [f"{k}: {float(v[0]) / max(float(v[1]), 1e-9) * 100:7.3f} (101x)"
               for k, v in self.accuracies.items()])
        self.accuracies = {k: [0.0, 0.0] for k in self.accuracies}
        return result

    def _estimate_loss(self, logits, x2, *args, scale=1.0, **kwargs):
        V = logits.shape[-1]
        loss_sum, ntoken = scaled_cross_entropy_sum_count(
            logits.reshape(-1, V), x2.reshape(-1), scale, self.ignore_index)
        # Matches PyTorch: loss_sum / ntoken if ntoken > 0 else loss_sum.
        loss = jnp.where(ntoken > 0,
                         loss_sum / jnp.maximum(ntoken, 1).astype(jnp.float32),
                         loss_sum)
        # TODO(synk): per-token losses are not materialized (forward()/infer()
        # discard them); only the masked sum + token count leave the kernel.
        return loss, (ntoken, None)

    def infer(self, x1, x2, *args, **kwargs):
        results = self._estimate_loss(x1, x2)

        def calculate_acc(a, b, key="overall"):
            pred = jnp.argmax(a, axis=-1).reshape(-1)
            tgt = b.reshape(-1)
            mask = tgt != self.ignore_index
            if key not in self.accuracies:
                self.accuracies[key] = [0.0, 0.0]
            metric = self.accuracies[key]
            # Accumulate device arrays; no per-step host float() sync.
            metric[0] = metric[0] + ((pred == tgt) & mask).sum()
            metric[1] = metric[1] + mask.sum()

        calculate_acc(x1, x2)
        if self.infer_mode == "ll" and x1.ndim == 4:
            K = x1.shape[1]
            for i in range(K):
                calculate_acc(x1[:, i], x2[:, i], key=f"acc{i}")
        return results

    def predict(self, x1, x2, negative):
        # TODO(synk): small argmax/compare bookkeeping kept in plain jnp (no
        # dedicated Pallas kernel); negligible vs. the CE pass.
        diff = x2.shape[-1] - negative.shape[-1]
        if diff == 2:
            sli = slice(1, -1)
        elif diff == 1:
            sli = slice(None, -1)
        else:
            sli = slice(None)
        if self.infer_mode == "ll" and x1.ndim == 4:
            logp = jax.nn.log_softmax(x1, axis=-1)
            log_probs = jnp.take_along_axis(logp, x2[..., None], axis=-1)
            log_probs = log_probs[..., 0][..., sli].sum(-1)
            prediction = jnp.argmax(log_probs, axis=-1)
            ntrue = (prediction == 0).sum()
            return x1.shape[0], ntrue
        else:
            pred_tok = jnp.argmax(x1[:, sli], axis=-1)
            gold = x2[:, sli][:, None, :]
            labels = jnp.concatenate([gold, negative], axis=1)
            match_logits = (pred_tok[:, None, :] == labels).sum(-1)
            prediction = jnp.argmax(match_logits, axis=-1)
            ntrue = (prediction == 0).sum()
            return x1.shape[0], ntrue

    def forward(self, x1, x2, *args, negative=None, **kwargs):
        nsample, ntrue = self.predict(x1, x2, negative)
        if not self.training:
            loss, (ntoken, _) = self.infer(x1, x2, *args, **kwargs)
            extra = {"ntoken": ntoken, "main_loss": loss,
                     "nsample": nsample, "ntrue": ntrue}
            return loss, (ntoken, extra)
        scale = jnp.exp(self.logit_scale)
        loss, (ntoken, _) = self._estimate_loss(
            x1, x2, *args, scale=scale, **kwargs)
        extra = {"ntoken": ntoken, "main_loss": loss,
                 "nsample": nsample, "ntrue": ntrue}
        return loss, (ntoken, extra)

    __call__ = forward


if __name__ == "__main__":
    key = jax.random.PRNGKey(0)
    k1, k2, k3 = jax.random.split(key, 3)

    B, T, V = 2, 16, 512        # [batch, seq, vocab]
    PAD = 0

    x1 = jax.random.normal(k1, (B, T, V), dtype=jnp.float32)        # logits
    x2 = jax.random.randint(k2, (B, T), 1, V).astype(jnp.int32)     # targets
    x2 = x2.at[:, -3:].set(PAD)                                     # pad tail
    negative = jax.random.randint(k3, (B, 3, T - 1), 1, V).astype(jnp.int32)

    cfg = types.SimpleNamespace(scaling=True, infer_mode="greedy")
    vocab = types.SimpleNamespace(PAD_IDX=PAD)

    head = LMLossHead(cfg, vocab)
    loss, (ntoken, extra) = head(x1, x2, negative=negative)
    jax.block_until_ready(loss)

    # Pure-JAX reference for the fused scaled cross entropy.
    scale = jnp.exp(head.logit_scale)
    logp = jax.nn.log_softmax(scale * x1, axis=-1)
    nll = -jnp.take_along_axis(logp, x2[..., None], axis=-1)[..., 0]
    mask = x2 != PAD
    nll = jnp.where(mask, nll, 0.0)
    ref_ntoken = mask.sum()
    ref_loss = nll.sum() / ref_ntoken

    assert int(ntoken) == int(ref_ntoken)
    assert jnp.allclose(loss, ref_loss, rtol=1e-3, atol=1e-3)
    assert int(extra["nsample"]) == B
    assert 0 <= int(extra["ntrue"]) <= B

    # Odd row count: exercises the in-kernel tail-row masking (no padding).
    N_odd = B * T - 5
    ls, nt = scaled_cross_entropy_sum_count(
        x1.reshape(-1, V)[:N_odd], x2.reshape(-1)[:N_odd], scale, PAD)
    jax.block_until_ready(ls)
    ref_sum = nll.reshape(-1)[:N_odd].sum()
    ref_cnt = (x2.reshape(-1)[:N_odd] != PAD).sum()
    assert jnp.allclose(ls, ref_sum, rtol=1e-3, atol=1e-3)
    assert int(nt) == int(ref_cnt)

    # bf16 logits path (halves HBM read bytes; kernel upcasts per block).
    ls16, nt16 = scaled_cross_entropy_sum_count(
        x1.reshape(-1, V).astype(jnp.bfloat16), x2.reshape(-1), scale, PAD)
    jax.block_until_ready(ls16)
    assert jnp.allclose(ls16, nll.sum(), rtol=3e-2, atol=3e-2)
    assert int(nt16) == int(ref_ntoken)

    print("KERNEL_OK")
</pallas_src>

<mosaic_0001>
module attributes {stable_mosaic.version = 11 : i64} {
  func.func @_scaled_ce_partial_kernel(%arg0: i32, %arg1: memref<1xf32, #tpu.memory_space<smem>>, %arg2: memref<8x512xf32, #tpu.memory_space<vmem>>, %arg3: memref<8x1xi32, #tpu.memory_space<vmem>>, %arg4: memref<8x128xf32, #tpu.memory_space<vmem>>) attributes {dimension_semantics = [#tpu.dimension_semantics<parallel>], iteration_bounds = array<i64: 4>, scalar_prefetch = 0 : i64, scratch_operands = 0 : i64, tpu.core_type = #tpu.core_type<tc>, window_params = [{transform_indices = @transform_0, window_bounds = array<i64: 1>}, {transform_indices = @transform_1, window_bounds = array<i64: 8, 512>}, {transform_indices = @transform_2, window_bounds = array<i64: 8, 1>}, {transform_indices = @transform_3, window_bounds = array<i64: 8, 128>}]} {
    %c0 = arith.constant 0 : index
    %0 = memref.load %arg1[%c0] : memref<1xf32, #tpu.memory_space<smem>>
    %c0_0 = arith.constant 0 : index
    %c0_1 = arith.constant 0 : index
    %1 = vector.load %arg2[%c0_0, %c0_1] : memref<8x512xf32, #tpu.memory_space<vmem>>, vector<8x512xf32>
    %c0_2 = arith.constant 0 : index
    %c0_3 = arith.constant 0 : index
    %2 = vector.load %arg3[%c0_2, %c0_3] : memref<8x1xi32, #tpu.memory_space<vmem>>, vector<8x1xi32>
    %3 = tpu.iota {dimensions = array<i32: 1>} : vector<8x512xi32>
    %cst = arith.constant dense<0xFF800000> : vector<8xf32>
    %4 = vector.multi_reduction <maximumf>, %1, %cst [1] : vector<8x512xf32> to vector<8xf32>
    %5 = vector.shape_cast %4 : vector<8xf32> to vector<8x1xf32>
    %6 = vector.broadcast %2 : vector<8x1xi32> to vector<8x512xi32>
    %7 = arith.cmpi eq, %3, %6 : vector<8x512xi32>
    %cst_4 = arith.constant 0xFF800000 : f32
    %8 = vector.broadcast %cst_4 : f32 to vector<8x512xf32>
    %9 = arith.select %7, %1, %8 : vector<8x512xi1>, vector<8x512xf32>
    %cst_5 = arith.constant dense<0xFF800000> : vector<8xf32>
    %10 = vector.multi_reduction <maximumf>, %9, %cst_5 [1] : vector<8x512xf32> to vector<8xf32>
    %11 = vector.shape_cast %10 : vector<8xf32> to vector<8x1xf32>
    %12 = vector.broadcast %5 : vector<8x1xf32> to vector<8x512xf32>
    %13 = arith.subf %1, %12 : vector<8x512xf32>
    %14 = vector.broadcast %0 : f32 to vector<8x512xf32>
    %15 = arith.mulf %13, %14 : vector<8x512xf32>
    %16 = math.exp %15 : vector<8x512xf32>
    %cst_6 = arith.constant dense<0.000000e+00> : vector<8xf32>
    %17 = vector.multi_reduction <add>, %16, %cst_6 [1] : vector<8x512xf32> to vector<8xf32>
    %18 = vector.shape_cast %17 : vector<8xf32> to vector<8x1xf32>
    %c8_i32 = arith.constant 8 : i32
    %19 = arith.muli %arg0, %c8_i32 : i32
    %20 = tpu.iota {dimensions = array<i32: 0>} : vector<8x1xi32>
    %21 = vector.broadcast %19 : i32 to vector<8x1xi32>
    %22 = arith.addi %21, %20 : vector<8x1xi32>
    %c0_i32 = arith.constant 0 : i32
    %23 = vector.broadcast %c0_i32 : i32 to vector<8x1xi32>
    %24 = arith.cmpi ne, %2, %23 : vector<8x1xi32>
    %c32_i32 = arith.constant 32 : i32
    %25 = vector.broadcast %c32_i32 : i32 to vector<8x1xi32>
    %26 = arith.cmpi slt, %22, %25 : vector<8x1xi32>
    %27 = arith.andi %24, %26 : vector<8x1xi1>
    %28 = arith.subf %5, %11 : vector<8x1xf32>
    %29 = vector.broadcast %0 : f32 to vector<8x1xf32>
    %30 = arith.mulf %29, %28 : vector<8x1xf32>
    %31 = math.log %18 : vector<8x1xf32>
    %32 = arith.addf %30, %31 : vector<8x1xf32>
    %cst_7 = arith.constant 0.000000e+00 : f32
    %33 = vector.broadcast %cst_7 : f32 to vector<8x1xf32>
    %34 = arith.select %27, %32, %33 : vector<8x1xi1>, vector<8x1xf32>
    %cst_8 = arith.constant dense<0.000000e+00> : vector<1xf32>
    %35 = vector.multi_reduction <add>, %34, %cst_8 [0] : vector<8x1xf32> to vector<1xf32>
    %36 = vector.shape_cast %35 : vector<1xf32> to vector<1x1xf32>
    %37 = arith.extui %27 : vector<8x1xi1> to vector<8x1xi32>
    %38 = arith.sitofp %37 : vector<8x1xi32> to vector<8x1xf32>
    %cst_9 = arith.constant dense<0.000000e+00> : vector<1xf32>
    %39 = vector.multi_reduction <add>, %38, %cst_9 [0] : vector<8x1xf32> to vector<1xf32>
    %40 = vector.shape_cast %39 : vector<1xf32> to vector<1x1xf32>
    %41 = tpu.iota {dimensions = array<i32: 0>} : vector<8x128xi32>
    %c0_i32_10 = arith.constant 0 : i32
    %42 = vector.broadcast %c0_i32_10 : i32 to vector<8x128xi32>
    %43 = arith.cmpi eq, %41, %42 : vector<8x128xi32>
    %c1_i32 = arith.constant 1 : i32
    %44 = vector.broadcast %c1_i32 : i32 to vector<8x128xi32>
    %45 = arith.cmpi eq, %41, %44 : vector<8x128xi32>
    %cst_11 = arith.constant 0.000000e+00 : f32
    %46 = vector.shape_cast %40 : vector<1x1xf32> to vector<1x1xf32>
    %47 = vector.broadcast %46 : vector<1x1xf32> to vector<8x128xf32>
    %48 = vector.broadcast %cst_11 : f32 to vector<8x128xf32>
    %49 = arith.select %45, %47, %48 : vector<8x128xi1>, vector<8x128xf32>
    %50 = vector.shape_cast %36 : vector<1x1xf32> to vector<1x1xf32>
    %51 = vector.broadcast %50 : vector<1x1xf32> to vector<8x128xf32>
    %52 = arith.select %43, %51, %49 : vector<8x128xi1>, vector<8x128xf32>
    %c0_12 = arith.constant 0 : index
    %c0_13 = arith.constant 0 : index
    %53 = vector.load %arg4[%c0_12, %c0_13] : memref<8x128xf32, #tpu.memory_space<vmem>>, vector<8x128xf32>
    tpu.vector_store %arg4[%c0_12, %c0_13], %52 {strides = array<i32>} : memref<8x128xf32, #tpu.memory_space<vmem>>, vector<8x128xf32>,
    return
  }
  func.func @transform_0(%arg0: i32) -> i32 {
    %c0_i32 = arith.constant 0 : i32
    %c0_i32_0 = arith.constant 0 : i32
    return %c0_i32 : i32
  }
  func.func @transform_1(%arg0: i32) -> (i32, i32) {
    %c0_i32 = arith.constant 0 : i32
    %c0_i32_0 = arith.constant 0 : i32
    return %arg0, %c0_i32 : i32, i32
  }
  func.func @transform_2(%arg0: i32) -> (i32, i32) {
    %c0_i32 = arith.constant 0 : i32
    %c0_i32_0 = arith.constant 0 : i32
    return %arg0, %c0_i32 : i32, i32
  }
  func.func @transform_3(%arg0: i32) -> (i32, i32) {
    %c0_i32 = arith.constant 0 : i32
    %c0_i32_0 = arith.constant 0 : i32
    return %arg0, %c0_i32 : i32, i32
  }
}

</mosaic_0001>

<llo_original>
// kernel: tpu_custom_call.1
$region0: #{tpu_custom_call.1}
  #allocation0 [shape = 'u32[]', space=smem, size = 0x4, offset = 0x4, fixed_abs, tag = 'smem constant byte address 0x4 - core index']
  #allocation1 [shape = 'u32[72,128]{1,0:T(1,128)}', space=vmem, size = 0x9000, scoped, tag = 'internal scratch']
  #allocation2 [shape = 'f32[1]{0:T(128)S(6)}', space=smem, size = 0x200, scoped, tag = 'scoped memory for tpu_custom_call.1']
  %s0 = inlined_call_operand.<no memory space> [shape: f32[1], index: 0, kind: input, shape index: {}]
  %s1 = inlined_call_operand.hbm [shape: f32[32,512], index: 1, kind: input, shape index: {}]
  %s2 = inlined_call_operand.vmem [shape: s32[32,1], index: 2, kind: input, shape index: {}]
  %s3 = inlined_call_operand.hbm [shape: f32[32,128], index: 3, kind: output, shape index: {}]
  %s4 = sld [smem:[#allocation0]]
  $region49: #{tpu_custom_call.1} parent=0
    _
  %s6 = ssub.s32 1, %s4
  %s7 = scalar_select 0, %s6, %s4
  %8 = sst [smem:[#allocation2]] %s0
  $region1: #{tpu_custom_call.1} parent=0
    #allocation3 [shape = 'u8[32768]{0}', space=vmem, size = 0x8000, scoped, tag = 'input window, operand 1']
    #allocation4 [shape = 's32[2]{0}', space=sflag, size = 0x8, scoped, tag = 'scoped memory for tpu_custom_call.1']
    #allocation5 [shape = 's32[2]{0}', space=sflag, size = 0x8, scoped, tag = 'scoped memory for tpu_custom_call.1']
    #allocation6 [shape = 'u8[8192]{0}', space=vmem, size = 0x2000, scoped, tag = 'output window, operand 0']
    %9 = vsyncpa [#allocation4], 0
    %s10 = scalar_lea.sflag [#allocation4], 1
    %11 = vsyncpa %s10, 0
    %12 = vsyncpa [#allocation5], 0
    %s13 = scalar_lea.sflag [#allocation5], 1
    %14 = vsyncpa %s13, 0
    loop: start=0, step=1, limit=6
    $region2: #{tpu_custom_call.1} parent=1 // loop_pre_header
      _
    $region3: #{tpu_custom_call.1} parent=1 // loop_header
      %s16 = sphi 0, %s20
      %p17 = scmp.ge.s32.totalorder %s16, 6
      %s24 = sphi 0, %s24
      %s26 = sphi 0, %s24
      %s27 = sphi 0, %s26
      %s41 = sphi 0, %s27
      %s47 = sphi 0, %s49
      %s50 = sphi 0, %s47
      %s51 = sphi 0, %s50
      %s67 = sphi 0, %s51
      %s73 = sphi 0, %s75
      %s76 = sphi 0, %s73
      %s77 = sphi 0, %s76
      %s93 = sphi 0, %s77
      %s99 = sphi 0, %s101
      %s102 = sphi 0, %s99
      %s103 = sphi 0, %s102
      %s119 = sphi 0, %s103
    $region4: #{tpu_custom_call.1} parent=1 // loop_header_branch
      %19 = sbr.rel (%p17) target = $region8
    $region5: #{tpu_custom_call.1} parent=1 // loop_body
      %s21 = ssub.s32 %s16, 1
      %s22 = ssub.s32 %s16, 2
      %s23 = sadd.s32 %s16, 1
      %s25 = sadd.s32 %s24, 1
      %p28 = scmp.eq.s32.totalorder %s16, 3
      %p29 = scmp.ne.s32.totalorder %s24, %s26
      %p30 = scmp.eq.s32.totalorder %s16, 0
      %p31 = por %p29, %p30
      %p32 = scmp.ne.s32.totalorder %s24, %s26
      %p33 = scmp.eq.s32.totalorder %s21, 3
      %p34 = por %p32, %p33
      %p35 = scmp.ne.s32.totalorder %s26, %s27
      %p36 = scmp.eq.s32.totalorder %s21, 0
      %p37 = por %p35, %p36
      %p38 = scmp.ne.s32.totalorder %s26, %s27
      %p39 = scmp.eq.s32.totalorder %s22, 3
      %p40 = por %p38, %p39
      %p42 = scmp.ne.s32.totalorder %s27, %s41
      %p43 = scmp.eq.s32.totalorder %s22, 0
      %p44 = por %p42, %p43
      %s45 = ssub.s32 %s16, %s23
      %p46 = scmp.eq.s32.totalorder %s45, 0
      %s48 = sadd.s32 %s47, 1
      %s49 = scalar_select %p46, %s47, %s48
      %p52 = pneg %p46
      %p53 = scmp.eq.s32.totalorder %s16, 3
      %p54 = por %p52, %p53
      %p55 = scmp.ne.s32.totalorder %s47, %s50
      %p56 = scmp.eq.s32.totalorder %s16, 0
      %p57 = por %p55, %p56
      %p58 = scmp.ne.s32.totalorder %s47, %s50
      %p59 = scmp.eq.s32.totalorder %s21, 3
      %p60 = por %p58, %p59
      %p61 = scmp.ne.s32.totalorder %s50, %s51
      %p62 = scmp.eq.s32.totalorder %s21, 0
      %p63 = por %p61, %p62
      %p64 = scmp.ne.s32.totalorder %s50, %s51
      %p65 = scmp.eq.s32.totalorder %s22, 3
      %p66 = por %p64, %p65
      %p68 = scmp.ne.s32.totalorder %s51, %s67
      %p69 = scmp.eq.s32.totalorder %s22, 0
      %p70 = por %p68, %p69
      %s71 = ssub.s32 %s16, %s23
      %p72 = scmp.eq.s32.totalorder %s71, 0
      %s74 = sadd.s32 %s73, 1
      %s75 = scalar_select %p72, %s73, %s74
      %p78 = pneg %p72
      %p79 = scmp.eq.s32.totalorder %s16, 3
      %p80 = por %p78, %p79
      %p81 = scmp.ne.s32.totalorder %s73, %s76
      %p82 = scmp.eq.s32.totalorder %s16, 0
      %p83 = por %p81, %p82
      %p84 = scmp.ne.s32.totalorder %s73, %s76
      %p85 = scmp.eq.s32.totalorder %s21, 3
      %p86 = por %p84, %p85
      %p87 = scmp.ne.s32.totalorder %s76, %s77
      %p88 = scmp.eq.s32.totalorder %s21, 0
      %p89 = por %p87, %p88
      %p90 = scmp.ne.s32.totalorder %s76, %s77
      %p91 = scmp.eq.s32.totalorder %s22, 3
      %p92 = por %p90, %p91
      %p94 = scmp.ne.s32.totalorder %s77, %s93
      %p95 = scmp.eq.s32.totalorder %s22, 0
      %p96 = por %p94, %p95
      %s97 = ssub.s32 %s16, %s23
      %p98 = scmp.eq.s32.totalorder %s97, 0
      %s100 = sadd.s32 %s99, 1
      %s101 = scalar_select %p98, %s99, %s100
      %p104 = pneg %p98
      %p105 = scmp.eq.s32.totalorder %s16, 3
      %p106 = por %p104, %p105
      %p107 = scmp.ne.s32.totalorder %s99, %s102
      %p108 = scmp.eq.s32.totalorder %s16, 0
      %p109 = por %p107, %p108
      %p110 = scmp.ne.s32.totalorder %s99, %s102
      %p111 = scmp.eq.s32.totalorder %s21, 3
      %p112 = por %p110, %p111
      %p113 = scmp.ne.s32.totalorder %s102, %s103
      %p114 = scmp.eq.s32.totalorder %s21, 0
      %p115 = por %p113, %p114
      %p116 = scmp.ne.s32.totalorder %s102, %s103
      %p117 = scmp.eq.s32.totalorder %s22, 3
      %p118 = por %p116, %p117
      %p120 = scmp.ne.s32.totalorder %s103, %s119
      %p121 = scmp.eq.s32.totalorder %s22, 0
      %p122 = por %p120, %p121
      %p123 = scmp.le.s32.totalorder 1, %s16
      %p124 = scmp.lt.s32.totalorder %s16, 5
      %p125 = pnand %p123, %p124
      %p126 = pneg %p125
      // Predicated region
      $region9: #{tpu_custom_call.1} parent=5 // pred_check
        _
      $region10: #{tpu_custom_call.1} parent=5 // pred_check_branch
        %128 = sbr.rel (%p125) target = $region12
      $region11: #{tpu_custom_call.1} parent=5 // pred_region
        %s129 = ssub.s32 %s16, 1
        // Predicated region
        $region13: #{tpu_custom_call.1} parent=11 // pred_check
          %p130 = pneg %p37
        $region14: #{tpu_custom_call.1} parent=11 // pred_check_branch
          %132 = sbr.rel (%p130) target = $region16
        $region15: #{tpu_custom_call.1} parent=11 // pred_region
          _
        $region16: #{tpu_custom_call.1} parent=11 // pred_fallthru
          _
      $region12: #{tpu_custom_call.1} parent=5 // pred_fallthru
        _
      %p133 = scmp.lt.s32.totalorder %s16, 4
      // Predicated region
      $region17: #{tpu_custom_call.1} parent=5 // pred_check
        %p134 = pneg %p133
      $region18: #{tpu_custom_call.1} parent=5 // pred_check_branch
        %136 = sbr.rel (%p134) target = $region20
      $region19: #{tpu_custom_call.1} parent=5 // pred_region
        // Predicated region
        $region21: #{tpu_custom_call.1} parent=19 // pred_check
          %p137 = pneg %p57
        $region22: #{tpu_custom_call.1} parent=19 // pred_check_branch
          %139 = sbr.rel (%p137) target = $region24
        $region23: #{tpu_custom_call.1} parent=19 // pred_region
          %s140 = sand.u32 %s47, 1
          %s141 = scalar_lea.sflag [#allocation4], %s140
          %s142 = sand.u32 %s47, 1
          %s143 = smul.addr %s142, 32
          %s144 = scalar_lea.vmem [#allocation3], %s143
          %146 = vsyncadd %s141, 0
          %s147 = smul.addr %s16, 4
          %s148 = smul.addr %s147, 8
          %s149 = scalar_lea.hbm %s1, %s148
          %s151 = sshll.u32 %s149, 4
          %s152 = int_to_ptr.hbm [resolvable:$true] %s151
          %s153 = sshll.u32 %s144, 4
          %s154 = int_to_ptr.vmem [resolvable:$true] %s153
          %156 = dma.hbm_to_vmem [thread:$0]  %s152, 512, %s154, %s141
        $region24: #{tpu_custom_call.1} parent=19 // pred_fallthru
          _
        // Predicated region
        $region25: #{tpu_custom_call.1} parent=19 // pred_check
          %p157 = pneg %p83
        $region26: #{tpu_custom_call.1} parent=19 // pred_check_branch
          %159 = sbr.rel (%p157) target = $region28
        $region27: #{tpu_custom_call.1} parent=19 // pred_region
          %p160 = scmp.lt.s32.totalorder %s16, 3
          %s161 = scalar_select %p160, %s16, 3
          %s162 = smul.addr %s161, 8
          %s163 = scalar_lea.vmem %s2, %s162
        $region28: #{tpu_custom_call.1} parent=19 // pred_fallthru
          _
      $region20: #{tpu_custom_call.1} parent=5 // pred_fallthru
        _
      %p164 = scmp.le.s32.totalorder 1, %s16
      %p165 = scmp.lt.s32.totalorder %s16, 5
      %p166 = pnand %p164, %p165
      %p167 = pneg %p166
      // Predicated region
      $region29: #{tpu_custom_call.1} parent=5 // pred_check
        _
      $region30: #{tpu_custom_call.1} parent=5 // pred_check_branch
        %169 = sbr.rel (%p166) target = $region32
      $region31: #{tpu_custom_call.1} parent=5 // pred_region
        %s170 = ssub.s32 %s16, 1
        %s171 = sand.u32 %s50, 1
        %s172 = scalar_lea.sflag [#allocation4], %s171
        %s173 = sand.u32 %s50, 1
        %s174 = smul.addr %s173, 32
        %s175 = scalar_lea.vmem [#allocation3], %s174
        // Predicated region
        $region33: #{tpu_custom_call.1} parent=31 // pred_check
          %p176 = pneg %p63
        $region34: #{tpu_custom_call.1} parent=31 // pred_check_branch
          %178 = sbr.rel (%p176) target = $region36
        $region35: #{tpu_custom_call.1} parent=31 // pred_region
          %180 = dma.done %s172, 512
        $region36: #{tpu_custom_call.1} parent=31 // pred_fallthru
          _
        %p181 = pneg %p37
        %p182 = pneg %p34
        %s183 = sand.u32 %s50, 1
        %s184 = scalar_lea.sflag [#allocation4], %s183
        %s185 = sand.u32 %s50, 1
        %s186 = smul.addr %s185, 32
        %s187 = scalar_lea.vmem [#allocation3], %s186
        %p188 = pneg %p63
        %p189 = pneg %p60
        %p190 = scmp.lt.s32.totalorder %s21, 3
        %s191 = scalar_select %p190, %s21, 3
        %s192 = smul.addr %s191, 8
        %s193 = scalar_lea.vmem %s2, %s192
        %p194 = pneg %p89
        %p195 = pneg %p86
        %p196 = pneg %p115
        %p197 = pneg %p112
        %s198 = sand.u32 %s102, 1
        %s199 = scalar_lea.sflag [#allocation5], %s198
        %s200 = sand.u32 %s102, 1
        %s201 = smul.addr %s200, 8
        %s202 = scalar_lea.vmem [#allocation6], %s201
        %p203 = scmp.lt.s32.totalorder %s21, 3
        %s204 = scalar_select %p203, %s21, 3
        %s205 = smul.addr %s204, 8
        %s206 = scalar_lea.vmem %s2, %s205
        %s207 = sld [smem:[#allocation2]]
        %v208 = vld [vmem:[%s175] sm:$0xff]
        %v209 = vld [vmem:[%s175 + $0x8] sm:$0xff]
        %v210 = vld [vmem:[%s175 + $0x10] sm:$0xff]
        %v211 = vld [vmem:[%s175 + $0x18] sm:$0xff]
        %v212 = vld [vmem:[%s206] sm:$0xff]
        %v213 = vlaneseq
        %v214 = vand.u32 %v213, 127
        %v215 = vadd.s32 %v214, 128
        %v216 = vadd.s32 %v214, 256
        %v217 = vadd.s32 %v214, 384
        %v218 = vmax.f32 %v208, %v209
        %v219 = vmax.f32 %v210, %v211
        %v220 = vmax.f32 %v218, %v219
        %221 = vmax.xlane.f32.xlu0 %v220
        %v222 = vpop.xlane.xlu0 %221
        %223 = vset.pattern.permute.xlu0 0
        %224 = vperm.xlu0 %223, %v212
        %v225 = vpop.permute.xlu0 %224
        %vm226 = vcmp.eq.s32.totalorder %v214, %v225
        %vm227 = vcmp.eq.s32.totalorder %v215, %v225
        %vm228 = vcmp.eq.s32.totalorder %v216, %v225
        %vm229 = vcmp.eq.s32.totalorder %v217, %v225
        %v230 = vsel %vm226, %v208, -inf
        %v231 = vsel %vm227, %v209, -inf
        %v232 = vsel %vm228, %v210, -inf
        %v233 = vsel %vm229, %v211, -inf
        %v234 = vmax.f32 %v230, %v231
        %v235 = vmax.f32 %v232, %v233
        %v236 = vmax.f32 %v234, %v235
        %237 = vmax.xlane.f32.xlu0 %v236
        %v238 = vpop.xlane.xlu0 %237
        %v239 = vsub.f32 %v208, %v222
        %v240 = vsub.f32 %v209, %v222
        %v241 = vsub.f32 %v210, %v222
        %v242 = vsub.f32 %v211, %v222
        %v243 = vstv %s207
        %v244 = vmul.f32 %v239, %v243
        %v245 = vmul.f32 %v240, %v243
        %v246 = vmul.f32 %v241, %v243
        %v247 = vmul.f32 %v242, %v243
        %v248 = vmul.f32 %v244, 1.442695
        %v249 = vpow.pop %v248
        %v250 = vmul.f32 %v245, 1.442695
        %v251 = vpow.pop %v250
        %v252 = vmul.f32 %v246, 1.442695
        %v253 = vpow.pop %v252
        %v254 = vmul.f32 %v247, 1.442695
        %v255 = vpow.pop %v254
        %v256 = vadd.f32 %v249, %v251
        %v257 = vadd.f32 %v256, %v253
        %v258 = vadd.f32 %v257, %v255
        %259 = vadd.xlane.f32.xlu0 %v258
        %v260 = vpop.xlane.xlu0 %259
        %s261 = smul.u32 %s21, 8
        %v262 = vlaneseq
        %v263 = vshrl.u32 %v262, 7
        %v264 = vstv %s261
        %v265 = vadd.s32 %v264, %v263
        %vm266 = vcmp.ne.s32.totalorder %v212, 0
        %vm267 = vcmp.lt.s32.totalorder %v265, 32
        %vm268 = vmand %vm266, %vm267
        %v269 = vsub.f32 %v222, %v238
        %v270 = vmul.f32 %v243, %v269
        %v271 = vlog2.pop %v260
        %v272 = vmul.f32 %v271, 0.6931472
        %v273 = vadd.f32 %v270, %v272
        %v274 = vsel %vm268, %v273, 0.0
        %vm275 = vcmask 7168
        %v276 = vsel %vm275, %v274, 0.0
        %v277 = vrot.slane %v276, 4
        %v278 = vadd.f32 %v276, %v277
        %v279 = vrot.slane %v278, 2
        %v280 = vadd.f32 %v278, %v279
        %v281 = vrot.slane %v280, 1
        %v282 = vadd.f32 %v280, %v281
        %v283 = vsel %vm268, 1, 0
        %v284 = vcvt.s32.f32 %v283
        %v285 = vsel %vm275, %v284, 0.0
        %v286 = vrot.slane %v285, 4
        %v287 = vadd.f32 %v285, %v286
        %v288 = vrot.slane %v287, 2
        %v289 = vadd.f32 %v287, %v288
        %v290 = vrot.slane %v289, 1
        %v291 = vadd.f32 %v289, %v290
        %vm292 = vcmp.eq.s32.totalorder %v263, 0
        %vm293 = vcmp.eq.s32.totalorder %v263, 1
        %295 = vset.pattern.permute.xlu0 0
        %296 = vperm.xlu0 %295, %v291
        %v297 = vpop.permute.xlu0 %296
        %v299 = vsel %vm293, %v297, 0.0
        %301 = vset.pattern.permute.xlu0 0
        %302 = vperm.xlu0 %301, %v282
        %v303 = vpop.permute.xlu0 %302
        %v305 = vsel %vm292, %v303, %v299
        %306 = vst [vmem:[%s202] sm:$0xff] %v305
        %s307 = sand.u32 %s102, 1
        %s308 = scalar_lea.sflag [#allocation5], %s307
        %s309 = sand.u32 %s102, 1
        %s310 = smul.addr %s309, 8
        %s311 = scalar_lea.vmem [#allocation6], %s310
        // Predicated region
        $region37: #{tpu_custom_call.1} parent=31 // pred_check
          %p312 = pneg %p112
        $region38: #{tpu_custom_call.1} parent=31 // pred_check_branch
          %314 = sbr.rel (%p312) target = $region40
        $region39: #{tpu_custom_call.1} parent=31 // pred_region
          %316 = vsyncadd %s308, 0
          %s317 = smul.addr %s21, 8
          %s318 = scalar_lea.hbm %s3, %s317
          %s320 = sshll.u32 %s311, 4
          %s321 = int_to_ptr.vmem [resolvable:$true] %s320
          %s322 = sshll.u32 %s318, 4
          %s323 = int_to_ptr.hbm [resolvable:$true] %s322
          %325 = dma.vmem_to_hbm [thread:$0]  %s321, 128, %s323, %s308
        $region40: #{tpu_custom_call.1} parent=31 // pred_fallthru
          _
      $region32: #{tpu_custom_call.1} parent=5 // pred_fallthru
        _
      %p326 = scmp.le.s32.totalorder 2, %s16
      // Predicated region
      $region41: #{tpu_custom_call.1} parent=5 // pred_check
        %p327 = pneg %p326
      $region42: #{tpu_custom_call.1} parent=5 // pred_check_branch
        %329 = sbr.rel (%p327) target = $region44
      $region43: #{tpu_custom_call.1} parent=5 // pred_region
        %s330 = ssub.s32 %s16, 2
        // Predicated region
        $region45: #{tpu_custom_call.1} parent=43 // pred_check
          %p331 = pneg %p118
        $region46: #{tpu_custom_call.1} parent=43 // pred_check_branch
          %333 = sbr.rel (%p331) target = $region48
        $region47: #{tpu_custom_call.1} parent=43 // pred_region
          %s334 = sand.u32 %s103, 1
          %s335 = scalar_lea.sflag [#allocation5], %s334
          %s336 = sand.u32 %s103, 1
          %s337 = smul.addr %s336, 8
          %s338 = scalar_lea.vmem [#allocation6], %s337
          %340 = dma.done %s335, 128
        $region48: #{tpu_custom_call.1} parent=43 // pred_fallthru
          _
      $region44: #{tpu_custom_call.1} parent=5 // pred_fallthru
        _
    $region6: #{tpu_custom_call.1} parent=1 // loop_footer
      %s20 = sadd.s32 1, %s16
    $region7: #{tpu_custom_call.1} parent=1 // loop_footer_branch
      %15 = sbr.rel target = $region3
    $region8: #{tpu_custom_call.1} parent=1 // loop_exit
      _
    %341 = vsyncpa [#allocation4], 1
    %s342 = scalar_lea.sflag [#allocation4], 1
    %343 = vsyncpa %s342, 1
    %344 = vsyncpa [#allocation5], 1
    %s345 = scalar_lea.sflag [#allocation5], 1
    %346 = vsyncpa %s345, 1

</llo_original>
